<compile_context>
chip_gen: v7x
topology: tpu7x:2x2x1
jax: 0.10.0
libtpu: 0.0.40
codegen_flags: <defaults>
</compile_context>

<pallas_src>
import functools

import jax
import jax.numpy as jnp
from jax.experimental import pallas as pl
from jax.experimental.pallas import tpu as pltpu


_BYTES_PER_STEP_TARGET = 2 * 1024 * 1024   # ~2 MiB of x moved per grid step
_VMEM_LIMIT_BYTES = 32 * 1024 * 1024       # explicit scoped-VMEM budget


def _largest_divisor(n, limit, align=1):
    """Largest d with d | n, d % align == 0 and d <= limit (0 if none)."""
    best = 0
    d = 1
    while d * d <= n:
        if n % d == 0:
            for cand in (d, n // d):
                if cand <= limit and cand % align == 0 and cand > best:
                    best = cand
        d += 1
    return best


def _pick_channel_tile(c, itemsize):
    packing = max(1, 4 // itemsize)            # rows packed per sublane (1/2/4)
    for align in (8 * packing, 8):             # dtype-aware, fall back to 8
        t = _largest_divisor(c, 128, align)
        if t:
            return t
    return c                                   # full-dim block is always legal


def _pick_batch_spatial_tiles(n, hw_pad, tc, itemsize, channel_blocks):
    # Lane tile: as many lanes as the byte budget allows with one image.
    thw_cap = max(128,
                  (_BYTES_PER_STEP_TARGET // max(1, tc * itemsize)) // 128 * 128)
    thw = _largest_divisor(hw_pad, min(hw_pad, thw_cap), 128) or hw_pad
    # Batch tile: fill the remaining byte budget with extra images, but keep
    # at least two parallel grid steps when C fits in one channel block so
    # the stats pass still splits across the two v7x TensorCores.
    tn_cap = max(1, _BYTES_PER_STEP_TARGET // max(1, tc * thw * itemsize))
    if channel_blocks == 1 and n >= 2:
        tn_cap = min(tn_cap, n // 2)
    tn = _largest_divisor(n, min(n, max(1, tn_cap)), 1) or 1
    return tn, thw


def _stats_kernel(x_ref, stat_ref):
    """Accumulate per-channel [sum, sum_sq] over the HW grid axis."""
    @pl.when(pl.program_id(2) == 0)
    def _():
        stat_ref[...] = jnp.zeros_like(stat_ref)

    x = x_ref[...].astype(jnp.float32)                            # (tn, tc, thw)
    stat_ref[0, :, 0:1] += jnp.sum(x, axis=(0, 2))[:, None]       # sum
    stat_ref[0, :, 1:2] += jnp.sum(x * x, axis=(0, 2))[:, None]   # sum of squares


def _norm_kernel(x_ref, ss_ref, o_ref, *, act_name, act_param, compute_dtype):
    """y = x * scale + shift followed by the activation (one pass)."""
    x = x_ref[...].astype(compute_dtype)                          # (tn, tc, thw)
    scale = ss_ref[:, 0:1].astype(compute_dtype)[None]            # (1, tc, 1)
    shift = ss_ref[:, 1:2].astype(compute_dtype)[None]

    y = x * scale + shift
    if act_name == "leaky_relu":
        y = jnp.where(y >= 0, y, y * act_param)
    elif act_name == "elu":
        y = jnp.where(y >= 0, y, act_param * (jnp.exp(y) - 1.0))
    # 'identity' -> no-op

    o_ref[...] = y.astype(o_ref.dtype)


def inplace_abn_forward(x_nchw, weight, bias, running_mean, running_var, *,
                        eps=1e-5, momentum=0.1,
                        act_name="leaky_relu", act_param=0.01):
    """x_nchw: (N, C, H, W); weight/bias/running_*: (C,).
    Returns (y, new_running_mean, new_running_var)."""
    n, c, h, w = x_nchw.shape
    hw = h * w
    m = n * hw
    itemsize = jnp.dtype(x_nchw.dtype).itemsize

    # Free layout change (no data movement): NCHW -> (N, C, H*W).
    x3d = x_nchw.reshape(n, c, hw)

    # Lane-dense padding: HW up to a multiple of 128 so every block uses full
    # 128-lane stores (the lane-sparse fallback costs up to ~4.5x wall clock).
    hw_pad = ((hw + 127) // 128) * 128
    if hw_pad != hw:
        x3d = jnp.pad(x3d, ((0, 0), (0, 0), (0, hw_pad - hw)))

    tc = _pick_channel_tile(c, itemsize)
    channel_blocks = c // tc
    tn, thw = _pick_batch_spatial_tiles(n, hw_pad, tc, itemsize, channel_blocks)
    grid = (channel_blocks, n // tn, hw_pad // thw)   # reduction axis last

    # ---- Phase 0: per-(N-slab, channel) partial [sum, sum_sq] ----------------
    partial_stats = pl.pallas_call(
        _stats_kernel,
        out_shape=jax.ShapeDtypeStruct((n // tn, c, 2), jnp.float32),
        grid_spec=pl.GridSpec(
            grid=grid,
            in_specs=[pl.BlockSpec((tn, tc, thw),
                                   lambda ci, ni, mi: (ni, ci, mi))],
            out_specs=pl.BlockSpec((1, tc, 2),
                                   lambda ci, ni, mi: (ni, ci, 0))),
        compiler_params=pltpu.CompilerParams(
            dimension_semantics=("parallel", "parallel", "arbitrary"),
            vmem_limit_bytes=_VMEM_LIMIT_BYTES),
    )(x3d)

    # ---- Tiny per-channel epilogue (C-length math) in plain XLA --------------
    stats = jnp.sum(partial_stats, axis=0)                 # (C, 2)
    mean = stats[:, 0] / m
    # E[x^2] - E[x]^2 with f32 accumulators; clamp tiny negative cancellation.
    var = jnp.maximum(stats[:, 1] / m - mean * mean, 0.0)  # biased batch var
    inv_std = jax.lax.rsqrt(var + eps)
    w_ = (jnp.ones((c,), jnp.float32) if weight is None
          else weight.astype(jnp.float32))
    b_ = (jnp.zeros((c,), jnp.float32) if bias is None
          else bias.astype(jnp.float32))
    scale = w_ * inv_std
    shift = b_ - mean * scale
    scale_shift = jnp.stack([scale, shift], axis=-1)       # (C, 2)

    # Running-stat momentum update (PyTorch uses the unbiased batch variance).
    unbiased_var = var * (m / max(m - 1, 1))
    new_running_mean = ((1.0 - momentum) * running_mean.astype(jnp.float32)
                        + momentum * mean).astype(running_mean.dtype)
    new_running_var = ((1.0 - momentum) * running_var.astype(jnp.float32)
                       + momentum * unbiased_var).astype(running_var.dtype)

    # ---- Phase 1: normalize + activation, in place ----------------------------
    # bf16 math on bf16 inputs keeps vreg pressure low on v6e/v7x; f32 otherwise.
    # TODO(synk): v5e has no bf16 VALU; a per-chip f32 fallback would need a
    # trace-time pltpu.get_tpu_info() query.
    compute_dtype = jnp.bfloat16 if x3d.dtype == jnp.bfloat16 else jnp.float32
    out3d = pl.pallas_call(
        functools.partial(_norm_kernel, act_name=act_name,
                          act_param=float(act_param),
                          compute_dtype=compute_dtype),
        out_shape=jax.ShapeDtypeStruct((n, c, hw_pad), x3d.dtype),
        grid_spec=pl.GridSpec(
            grid=grid,
            in_specs=[pl.BlockSpec((tn, tc, thw),
                                   lambda ci, ni, mi: (ni, ci, mi)),
                      pl.BlockSpec((tc, 2), lambda ci, ni, mi: (ci, 0))],
            out_specs=pl.BlockSpec((tn, tc, thw),
                                   lambda ci, ni, mi: (ni, ci, mi))),
        input_output_aliases={0: 0},   # in-place normalize (InplaceABN semantics)
        compiler_params=pltpu.CompilerParams(
            dimension_semantics=("parallel", "parallel", "parallel"),
            vmem_limit_bytes=_VMEM_LIMIT_BYTES),
    )(x3d, scale_shift)

    if hw_pad != hw:
        out3d = out3d[:, :, :hw]
    return out3d.reshape(n, c, h, w), new_running_mean, new_running_var


def _reference(x, weight, bias, eps=1e-5, act_param=0.01):
    # Pure-JAX reference: training-mode batch_norm + leaky_relu (NCHW).
    mean = jnp.mean(x, axis=(0, 2, 3), keepdims=True)
    var = jnp.mean((x - mean) ** 2, axis=(0, 2, 3), keepdims=True)
    y = (x - mean) / jnp.sqrt(var + eps)
    y = y * weight.reshape(1, -1, 1, 1) + bias.reshape(1, -1, 1, 1)
    return jnp.where(y >= 0, y, y * act_param)


if __name__ == "__main__":
    key = jax.random.PRNGKey(0)
    N, C, H, W = 2, 4, 16, 16
    x = jax.random.normal(key, (N, C, H, W), dtype=jnp.float32)

    # InplaceAbn.reset_parameters(): weight=1, bias=0, running_mean=0, running_var=1.
    weight = jnp.ones((C,), dtype=jnp.float32)
    bias = jnp.zeros((C,), dtype=jnp.float32)
    running_mean = jnp.zeros((C,), dtype=jnp.float32)
    running_var = jnp.ones((C,), dtype=jnp.float32)

    fwd = jax.jit(functools.partial(inplace_abn_forward, eps=1e-5, momentum=0.1,
                                    act_name="leaky_relu", act_param=0.01))
    out, new_rm, new_rv = fwd(x, weight, bias, running_mean, running_var)
    out = jax.block_until_ready(out)

    ref = _reference(x, weight, bias)
    assert out.shape == (N, C, H, W)
    assert jnp.max(jnp.abs(out - ref)) < 1e-4

    # Running-stat update check against the PyTorch formula.
    mean_ref = jnp.mean(x, axis=(0, 2, 3))
    var_ref = jnp.var(x, axis=(0, 2, 3), ddof=1)
    assert jnp.max(jnp.abs(new_rm - 0.1 * mean_ref)) < 1e-4
    assert jnp.max(jnp.abs(new_rv - (0.9 + 0.1 * var_ref))) < 1e-4

    print("KERNEL_OK")
</pallas_src>

<mosaic_0001>
module attributes {stable_mosaic.version = 11 : i64} {
  func.func @_stats_kernel(%arg0: i32, %arg1: i32, %arg2: i32, %arg3: memref<1x4x256xf32, #tpu.memory_space<vmem>>, %arg4: memref<1x4x2xf32, #tpu.memory_space<vmem>>) attributes {dimension_semantics = [#tpu.dimension_semantics<parallel>, #tpu.dimension_semantics<parallel>, #tpu.dimension_semantics<arbitrary>], iteration_bounds = array<i64: 1, 2, 1>, scalar_prefetch = 0 : i64, scratch_operands = 0 : i64, tpu.core_type = #tpu.core_type<tc>, window_params = [{transform_indices = @transform_0, window_bounds = array<i64: 1, 4, 256>}, {transform_indices = @transform_1, window_bounds = array<i64: 1, 4, 2>}]} {
    %c0_i32 = arith.constant 0 : i32
    %0 = arith.cmpi eq, %arg2, %c0_i32 : i32
    %1 = arith.extui %0 : i1 to i32
    %c0_i32_0 = arith.constant 0 : i32
    %2 = arith.cmpi ne, %1, %c0_i32_0 : i32
    scf.if %2 {
      %cst_15 = arith.constant 0.000000e+00 : f32
      %21 = vector.broadcast %cst_15 : f32 to vector<1x4x2xf32>
      %c0_16 = arith.constant 0 : index
      %c0_17 = arith.constant 0 : index
      %c0_18 = arith.constant 0 : index
      %22 = vector.load %arg4[%c0_16, %c0_17, %c0_18] : memref<1x4x2xf32, #tpu.memory_space<vmem>>, vector<1x4x2xf32>
      tpu.vector_store %arg4[%c0_16, %c0_17, %c0_18], %21 {strides = array<i32>} : memref<1x4x2xf32, #tpu.memory_space<vmem>>, vector<1x4x2xf32>,
    } else {
    }
    %c0 = arith.constant 0 : index
    %c0_1 = arith.constant 0 : index
    %c0_2 = arith.constant 0 : index
    %3 = vector.load %arg3[%c0, %c0_1, %c0_2] : memref<1x4x256xf32, #tpu.memory_space<vmem>>, vector<1x4x256xf32>
    %c0_3 = arith.constant 0 : index
    %c0_4 = arith.constant 0 : index
    %c0_5 = arith.constant 0 : index
    %4 = vector.load %arg4[%c0_3, %c0_4, %c0_5] : memref<1x4x2xf32, #tpu.memory_space<vmem>>, vector<1x4x1xf32>
    %5 = vector.shape_cast %4 : vector<1x4x1xf32> to vector<4x1xf32>
    %cst = arith.constant dense<0.000000e+00> : vector<4xf32>
    %6 = vector.multi_reduction <add>, %3, %cst [0, 2] : vector<1x4x256xf32> to vector<4xf32>
    %7 = vector.shape_cast %6 : vector<4xf32> to vector<4x1xf32>
    %8 = arith.addf %5, %7 : vector<4x1xf32>
    %c0_6 = arith.constant 0 : index
    %c0_7 = arith.constant 0 : index
    %c0_8 = arith.constant 0 : index
    %9 = vector.load %arg4[%c0_6, %c0_7, %c0_8] : memref<1x4x2xf32, #tpu.memory_space<vmem>>, vector<1x4x1xf32>
    %10 = vector.shape_cast %9 : vector<1x4x1xf32> to vector<4x1xf32>
    %11 = vector.shape_cast %8 : vector<4x1xf32> to vector<1x4x1xf32>
    tpu.vector_store %arg4[%c0_6, %c0_7, %c0_8], %11 {strides = array<i32>} : memref<1x4x2xf32, #tpu.memory_space<vmem>>, vector<1x4x1xf32>,
    %c0_9 = arith.constant 0 : index
    %c0_10 = arith.constant 0 : index
    %c1 = arith.constant 1 : index
    %12 = vector.load %arg4[%c0_9, %c0_10, %c1] : memref<1x4x2xf32, #tpu.memory_space<vmem>>, vector<1x4x1xf32>
    %13 = vector.shape_cast %12 : vector<1x4x1xf32> to vector<4x1xf32>
    %14 = arith.mulf %3, %3 : vector<1x4x256xf32>
    %cst_11 = arith.constant dense<0.000000e+00> : vector<4xf32>
    %15 = vector.multi_reduction <add>, %14, %cst_11 [0, 2] : vector<1x4x256xf32> to vector<4xf32>
    %16 = vector.shape_cast %15 : vector<4xf32> to vector<4x1xf32>
    %17 = arith.addf %13, %16 : vector<4x1xf32>
    %c0_12 = arith.constant 0 : index
    %c0_13 = arith.constant 0 : index
    %c1_14 = arith.constant 1 : index
    %18 = vector.load %arg4[%c0_12, %c0_13, %c1_14] : memref<1x4x2xf32, #tpu.memory_space<vmem>>, vector<1x4x1xf32>
    %19 = vector.shape_cast %18 : vector<1x4x1xf32> to vector<4x1xf32>
    %20 = vector.shape_cast %17 : vector<4x1xf32> to vector<1x4x1xf32>
    tpu.vector_store %arg4[%c0_12, %c0_13, %c1_14], %20 {strides = array<i32>} : memref<1x4x2xf32, #tpu.memory_space<vmem>>, vector<1x4x1xf32>,
    return
  }
  func.func @transform_0(%arg0: i32, %arg1: i32, %arg2: i32) -> (i32, i32, i32) {
    %c0_i32 = arith.constant 0 : i32
    return %arg1, %arg0, %arg2 : i32, i32, i32
  }
  func.func @transform_1(%arg0: i32, %arg1: i32, %arg2: i32) -> (i32, i32, i32) {
    %c0_i32 = arith.constant 0 : i32
    %c0_i32_0 = arith.constant 0 : i32
    return %arg1, %arg0, %c0_i32 : i32, i32, i32
  }
}

module attributes {stable_mosaic.version = 11 : i64} {
  func.func @_norm_kernel(%arg0: i32, %arg1: i32, %arg2: i32, %arg3: memref<1x4x256xf32, #tpu.memory_space<vmem>>, %arg4: memref<4x2xf32, #tpu.memory_space<vmem>>, %arg5: memref<1x4x256xf32, #tpu.memory_space<vmem>>) attributes {dimension_semantics = [#tpu.dimension_semantics<parallel>, #tpu.dimension_semantics<parallel>, #tpu.dimension_semantics<parallel>], iteration_bounds = array<i64: 1, 2, 1>, scalar_prefetch = 0 : i64, scratch_operands = 0 : i64, tpu.core_type = #tpu.core_type<tc>, window_params = [{transform_indices = @transform_0, window_bounds = array<i64: 1, 4, 256>}, {transform_indices = @transform_1, window_bounds = array<i64: 4, 2>}, {transform_indices = @transform_2, window_bounds = array<i64: 1, 4, 256>}]} {
    %c0 = arith.constant 0 : index
    %c0_0 = arith.constant 0 : index
    %c0_1 = arith.constant 0 : index
    %0 = vector.load %arg3[%c0, %c0_0, %c0_1] : memref<1x4x256xf32, #tpu.memory_space<vmem>>, vector<1x4x256xf32>
    %c0_2 = arith.constant 0 : index
    %c0_3 = arith.constant 0 : index
    %1 = vector.load %arg4[%c0_2, %c0_3] : memref<4x2xf32, #tpu.memory_space<vmem>>, vector<4x1xf32>
    %2 = vector.shape_cast %1 : vector<4x1xf32> to vector<1x4x1xf32>
    %c0_4 = arith.constant 0 : index
    %c1 = arith.constant 1 : index
    %3 = vector.load %arg4[%c0_4, %c1] : memref<4x2xf32, #tpu.memory_space<vmem>>, vector<4x1xf32>
    %4 = vector.shape_cast %3 : vector<4x1xf32> to vector<1x4x1xf32>
    %5 = vector.broadcast %2 : vector<1x4x1xf32> to vector<1x4x256xf32>
    %6 = arith.mulf %0, %5 : vector<1x4x256xf32>
    %7 = vector.broadcast %4 : vector<1x4x1xf32> to vector<1x4x256xf32>
    %8 = arith.addf %6, %7 : vector<1x4x256xf32>
    %cst = arith.constant 0.000000e+00 : f32
    %9 = vector.broadcast %cst : f32 to vector<1x4x256xf32>
    %10 = arith.cmpf oge, %8, %9 : vector<1x4x256xf32>
    %cst_5 = arith.constant 0.00999999977 : f32
    %11 = vector.broadcast %cst_5 : f32 to vector<1x4x256xf32>
    %12 = arith.mulf %8, %11 : vector<1x4x256xf32>
    %13 = arith.select %10, %8, %12 : vector<1x4x256xi1>, vector<1x4x256xf32>
    %c0_6 = arith.constant 0 : index
    %c0_7 = arith.constant 0 : index
    %c0_8 = arith.constant 0 : index
    %14 = vector.load %arg5[%c0_6, %c0_7, %c0_8] : memref<1x4x256xf32, #tpu.memory_space<vmem>>, vector<1x4x256xf32>
    tpu.vector_store %arg5[%c0_6, %c0_7, %c0_8], %13 {strides = array<i32>} : memref<1x4x256xf32, #tpu.memory_space<vmem>>, vector<1x4x256xf32>,
    return
  }
  func.func @transform_0(%arg0: i32, %arg1: i32, %arg2: i32) -> (i32, i32, i32) {
    %c0_i32 = arith.constant 0 : i32
    return %arg1, %arg0, %arg2 : i32, i32, i32
  }
  func.func @transform_1(%arg0: i32, %arg1: i32, %arg2: i32) -> (i32, i32) {
    %c0_i32 = arith.constant 0 : i32
    %c0_i32_0 = arith.constant 0 : i32
    return %arg0, %c0_i32 : i32, i32
  }
  func.func @transform_2(%arg0: i32, %arg1: i32, %arg2: i32) -> (i32, i32, i32) {
    %c0_i32 = arith.constant 0 : i32
    return %arg1, %arg0, %arg2 : i32, i32, i32
  }
}

</mosaic_0001>

<llo_original>
// kernel: inplace_abn_forward.2
$region0: #{inplace_abn_forward.2}
  #allocation0 [shape = 'u32[]', space=smem, size = 0x4, offset = 0x4, fixed_abs, tag = 'smem constant byte address 0x4 - core index']
  #allocation1 [shape = 'u32[144,128]{1,0:T(1,128)}', space=vmem, size = 0x12000, scoped, tag = 'internal scratch']
  %s0 = inlined_call_operand.vmem [shape: f32[2,4,256], index: 0, kind: input, shape index: {}]
  %s1 = inlined_call_operand.vmem [shape: f32[2,4,2], index: 1, kind: output, shape index: {}]
  %s2 = sld [smem:[#allocation0]]
  $region41: #{inplace_abn_forward.2} parent=0
    _
  %s4 = ssub.s32 1, %s2
  %s5 = scalar_select 0, %s4, %s2
  loop: start=0, step=1, limit=4
  $region2: #{inplace_abn_forward.2} parent=0 // loop_pre_header
    _
  $region3: #{inplace_abn_forward.2} parent=0 // loop_header
    %s7 = sphi 0, %s11
    %p8 = scmp.ge.s32.totalorder %s7, 4
    %s14 = sphi 0, %s33
    %s15 = sphi 0, %s29
    %s16 = sphi 0, %s25
    %s17 = sphi 0, %s14
    %s18 = sphi 0, %s15
    %s19 = sphi 0, %s16
    %s20 = sphi 0, %s17
    %s21 = sphi 0, %s18
    %s22 = sphi 0, %s19
    %s40 = sphi 0, %s42
    %s43 = sphi 0, %s40
    %s44 = sphi 0, %s43
    %s60 = sphi 0, %s44
    %s68 = sphi 0, %s70
    %s71 = sphi 0, %s68
    %s72 = sphi 0, %s71
    %s88 = sphi 0, %s72
  $region4: #{inplace_abn_forward.2} parent=0 // loop_header_branch
    %10 = sbr.rel (%p8) target = $region8
  $region5: #{inplace_abn_forward.2} parent=0 // loop_body
    %s12 = ssub.s32 %s7, 1
    %s13 = ssub.s32 %s7, 2
    %s23 = sadd.s32 1, %s16
    %p24 = scmp.ge.s32.totalorder %s23, 1
    %s25 = scalar_select %p24, 0, %s23
    %s26 = sadd.s32 1, %s15
    %s27 = scalar_select %p24, %s26, %s15
    %p28 = scmp.ge.s32.totalorder %s27, 2
    %s29 = scalar_select %p28, 0, %s27
    %s30 = sadd.s32 1, %s14
    %s31 = scalar_select %p28, %s30, %s14
    %p32 = scmp.ge.s32.totalorder %s31, 1
    %s33 = scalar_select %p32, 0, %s31
    %s34 = ssub.s32 %s15, %s29
    %s35 = ssub.s32 %s14, %s33
    %s36 = sor.u32 %s34, %s35
    %s37 = ssub.s32 %s16, %s25
    %s38 = sor.u32 %s36, %s37
    %p39 = scmp.eq.s32.totalorder %s38, 0
    %s41 = sadd.s32 %s40, 1
    %s42 = scalar_select %p39, %s40, %s41
    %p45 = pneg %p39
    %p46 = scmp.eq.s32.totalorder %s7, 1
    %p47 = por %p45, %p46
    %p48 = scmp.ne.s32.totalorder %s40, %s43
    %p49 = scmp.eq.s32.totalorder %s7, 0
    %p50 = por %p48, %p49
    %p51 = scmp.ne.s32.totalorder %s40, %s43
    %p52 = scmp.eq.s32.totalorder %s12, 1
    %p53 = por %p51, %p52
    %p54 = scmp.ne.s32.totalorder %s43, %s44
    %p55 = scmp.eq.s32.totalorder %s12, 0
    %p56 = por %p54, %p55
    %p57 = scmp.ne.s32.totalorder %s43, %s44
    %p58 = scmp.eq.s32.totalorder %s13, 1
    %p59 = por %p57, %p58
    %p61 = scmp.ne.s32.totalorder %s44, %s60
    %p62 = scmp.eq.s32.totalorder %s13, 0
    %p63 = por %p61, %p62
    %s64 = ssub.s32 %s15, %s29
    %s65 = ssub.s32 %s14, %s33
    %s66 = sor.u32 %s64, %s65
    %p67 = scmp.eq.s32.totalorder %s66, 0
    %s69 = sadd.s32 %s68, 1
    %s70 = scalar_select %p67, %s68, %s69
    %p73 = pneg %p67
    %p74 = scmp.eq.s32.totalorder %s7, 1
    %p75 = por %p73, %p74
    %p76 = scmp.ne.s32.totalorder %s68, %s71
    %p77 = scmp.eq.s32.totalorder %s7, 0
    %p78 = por %p76, %p77
    %p79 = scmp.ne.s32.totalorder %s68, %s71
    %p80 = scmp.eq.s32.totalorder %s12, 1
    %p81 = por %p79, %p80
    %p82 = scmp.ne.s32.totalorder %s71, %s72
    %p83 = scmp.eq.s32.totalorder %s12, 0
    %p84 = por %p82, %p83
    %p85 = scmp.ne.s32.totalorder %s71, %s72
    %p86 = scmp.eq.s32.totalorder %s13, 1
    %p87 = por %p85, %p86
    %p89 = scmp.ne.s32.totalorder %s72, %s88
    %p90 = scmp.eq.s32.totalorder %s13, 0
    %p91 = por %p89, %p90
    %p92 = scmp.le.s32.totalorder 1, %s7
    %p93 = scmp.lt.s32.totalorder %s7, 3
    %p94 = pnand %p92, %p93
    %p95 = pneg %p94
    // Predicated region
    $region9: #{inplace_abn_forward.2} parent=5 // pred_check
      _
    $region10: #{inplace_abn_forward.2} parent=5 // pred_check_branch
      %97 = sbr.rel (%p94) target = $region12
    $region11: #{inplace_abn_forward.2} parent=5 // pred_region
      %s98 = ssub.s32 %s7, 1
    $region12: #{inplace_abn_forward.2} parent=5 // pred_fallthru
      _
    %p99 = scmp.lt.s32.totalorder %s7, 2
    // Predicated region
    $region13: #{inplace_abn_forward.2} parent=5 // pred_check
      %p100 = pneg %p99
    $region14: #{inplace_abn_forward.2} parent=5 // pred_check_branch
      %102 = sbr.rel (%p100) target = $region16
    $region15: #{inplace_abn_forward.2} parent=5 // pred_region
      // Predicated region
      $region17: #{inplace_abn_forward.2} parent=15 // pred_check
        %p103 = pneg %p50
      $region18: #{inplace_abn_forward.2} parent=15 // pred_check_branch
        %105 = sbr.rel (%p103) target = $region20
      $region19: #{inplace_abn_forward.2} parent=15 // pred_region
        %s106 = smul.u32 2, %s16
        %p107 = scmp.lt.s32.totalorder %s15, 1
        %s108 = scalar_select %p107, %s15, 1
        %p109 = scmp.lt.s32.totalorder %s14, 0
        %s110 = scalar_select %p109, %s14, 0
        %p111 = scmp.lt.s32.totalorder %s106, 1
        %s112 = scalar_select %p111, %s106, 1
        %s113 = smul.addr %s110, 2
        %s114 = sadd.s32 %s112, %s113
        %s115 = smul.addr %s108, 2
        %s116 = sadd.s32 %s114, %s115
        %s117 = smul.addr %s116, 4
        %s118 = scalar_lea.vmem %s0, %s117
        %s119 = smul.u32 2, %s16
      $region20: #{inplace_abn_forward.2} parent=15 // pred_fallthru
        _
    $region16: #{inplace_abn_forward.2} parent=5 // pred_fallthru
      _
    %p120 = scmp.le.s32.totalorder 1, %s7
    %p121 = scmp.lt.s32.totalorder %s7, 3
    %p122 = pnand %p120, %p121
    %p123 = pneg %p122
    // Predicated region
    $region21: #{inplace_abn_forward.2} parent=5 // pred_check
      _
    $region22: #{inplace_abn_forward.2} parent=5 // pred_check_branch
      %125 = sbr.rel (%p122) target = $region24
    $region23: #{inplace_abn_forward.2} parent=5 // pred_region
      %s126 = ssub.s32 %s7, 1
      %s127 = smul.u32 2, %s19
      %p128 = scmp.lt.s32.totalorder %s18, 1
      %s129 = scalar_select %p128, %s18, 1
      %p130 = scmp.lt.s32.totalorder %s17, 0
      %s131 = scalar_select %p130, %s17, 0
      %p132 = scmp.lt.s32.totalorder %s127, 1
      %s133 = scalar_select %p132, %s127, 1
      %s134 = smul.addr %s131, 2
      %s135 = sadd.s32 %s133, %s134
      %s136 = smul.addr %s129, 2
      %s137 = sadd.s32 %s135, %s136
      %s138 = smul.addr %s137, 4
      %s139 = scalar_lea.vmem %s0, %s138
      %p140 = pneg %p56
      %p141 = pneg %p53
      %p142 = pneg %p84
      %p143 = pneg %p81
      %p144 = scmp.lt.s32.totalorder %s18, 1
      %s145 = scalar_select %p144, %s18, 1
      %p146 = scmp.lt.s32.totalorder %s17, 0
      %s147 = scalar_select %p146, %s17, 0
      %s148 = sadd.s32 %s147, %s145
      %s149 = smul.addr %s148, 4
      %s150 = scalar_lea.vmem %s1, %s149
      %s151 = smul.u32 2, %s19
      %p152 = scmp.lt.s32.totalorder %s18, 1
      %s153 = scalar_select %p152, %s18, 1
      %p154 = scmp.lt.s32.totalorder %s17, 0
      %s155 = scalar_select %p154, %s17, 0
      %p156 = scmp.lt.s32.totalorder %s151, 1
      %s157 = scalar_select %p156, %s151, 1
      %s158 = smul.addr %s155, 2
      %s159 = sadd.s32 %s157, %s158
      %s160 = smul.addr %s153, 2
      %s161 = sadd.s32 %s159, %s160
      %s162 = smul.addr %s161, 4
      %s163 = scalar_lea.vmem %s0, %s162
      %s164 = smul.u32 2, %s19
      %p165 = scmp.lt.s32.totalorder %s18, 1
      %s166 = scalar_select %p165, %s18, 1
      %p167 = scmp.lt.s32.totalorder %s17, 0
      %s168 = scalar_select %p167, %s17, 0
      %s169 = sadd.s32 %s168, %s166
      %s170 = smul.addr %s169, 4
      %s171 = scalar_lea.vmem %s1, %s170
      %p172 = scmp.eq.s32.totalorder %s19, 0
      // Predicated region
      $region25: #{inplace_abn_forward.2} parent=23 // pred_check
        %p173 = pneg %p172
      $region26: #{inplace_abn_forward.2} parent=23 // pred_check_branch
        %175 = sbr.rel (%p173) target = $region28
      $region27: #{inplace_abn_forward.2} parent=23 // pred_region
        %vm176 = vcmask 11264
        %177 = vst.msk [vmem:[%s171] sm:$0xf] %vm176, 0.0
      $region28: #{inplace_abn_forward.2} parent=23 // pred_fallthru
        _
      %v178 = vld [vmem:[%s163] sm:$0xff]
      %v179 = vld [vmem:[%s171] sm:$0xf]
      %v181 = vcombine.high %v178, %v178
      %vm183 = vcmask 1043456
      %v184 = vsel %vm183, %v178, 0.0
      %v185 = vsel %vm183, %v181, 0.0
      %v186 = vadd.f32 %v184, %v185
      %187 = vadd.xlane.f32.xlu0 %v186
      %v188 = vpop.xlane.xlu0 %187
      %v189 = vadd.f32 %v179, %v188
      %vm190 = vcmask 3072
      %191 = vst.msk [vmem:[%s171] sm:$0xf] %vm190, %v189
      %v192 = vld [vmem:[%s171] sm:$0xf]
      %v193 = vmul.f32 %v178, %v178
      %v195 = vcombine.high %v193, %v193
      %v197 = vsel %vm183, %v193, 0.0
      %v198 = vsel %vm183, %v195, 0.0
      %v199 = vadd.f32 %v197, %v198
      %200 = vadd.xlane.f32.xlu0 %v199
      %v201 = vpop.xlane.xlu0 %200
      %v202 = vadd.f32 %v192, %v201
      %vm203 = vcmask 11272
      %204 = vst.msk [vmem:[%s171] sm:$0xf] %vm203, %v202
      %p205 = scmp.lt.s32.totalorder %s18, 1
      %s206 = scalar_select %p205, %s18, 1
      %p207 = scmp.lt.s32.totalorder %s17, 0
      %s208 = scalar_select %p207, %s17, 0
      %s209 = sadd.s32 %s208, %s206
      %s210 = smul.addr %s209, 4
      %s211 = scalar_lea.vmem %s1, %s210
      // Predicated region
      $region29: #{inplace_abn_forward.2} parent=23 // pred_check
        %p212 = pneg %p81
      $region30: #{inplace_abn_forward.2} parent=23 // pred_check_branch
        %214 = sbr.rel (%p212) target = $region32
      $region31: #{inplace_abn_forward.2} parent=23 // pred_region
        _
      $region32: #{inplace_abn_forward.2} parent=23 // pred_fallthru
        _
    $region24: #{inplace_abn_forward.2} parent=5 // pred_fallthru
      _
    %p215 = scmp.le.s32.totalorder 2, %s7
    // Predicated region
    $region33: #{inplace_abn_forward.2} parent=5 // pred_check
      %p216 = pneg %p215
    $region34: #{inplace_abn_forward.2} parent=5 // pred_check_branch
      %218 = sbr.rel (%p216) target = $region36
    $region35: #{inplace_abn_forward.2} parent=5 // pred_region
      %s219 = ssub.s32 %s7, 2
      // Predicated region
      $region37: #{inplace_abn_forward.2} parent=35 // pred_check
        %p220 = pneg %p87
      $region38: #{inplace_abn_forward.2} parent=35 // pred_check_branch
        %222 = sbr.rel (%p220) target = $region40
      $region39: #{inplace_abn_forward.2} parent=35 // pred_region
        %p223 = scmp.lt.s32.totalorder %s21, 1
        %s224 = scalar_select %p223, %s21, 1
        %p225 = scmp.lt.s32.totalorder %s20, 0
        %s226 = scalar_select %p225, %s20, 0
        %s227 = sadd.s32 %s226, %s224
        %s228 = smul.addr %s227, 4
        %s229 = scalar_lea.vmem %s1, %s228
      $region40: #{inplace_abn_forward.2} parent=35 // pred_fallthru
        _
    $region36: #{inplace_abn_forward.2} parent=5 // pred_fallthru
      _
  $region6: #{inplace_abn_forward.2} parent=0 // loop_footer
    %s11 = sadd.s32 1, %s7
  $region7: #{inplace_abn_forward.2} parent=0 // loop_footer_branch
    %6 = sbr.rel target = $region3
  $region8: #{inplace_abn_forward.2} parent=0 // loop_exit
    _

// kernel: inplace_abn_forward.3
$region0: #{inplace_abn_forward.3}
  #allocation0 [shape = 'u32[]', space=smem, size = 0x4, offset = 0x4, fixed_abs, tag = 'smem constant byte address 0x4 - core index']
  #allocation1 [shape = 'u32[144,128]{1,0:T(1,128)}', space=vmem, size = 0x12000, scoped, tag = 'internal scratch']
  %s0 = inlined_call_operand.vmem [shape: f32[2,4,256], index: 0, kind: input, shape index: {}, may-alias: {0,2}]
  %s1 = inlined_call_operand.vmem [shape: f32[4,2], index: 1, kind: input, shape index: {}]
  %s2 = inlined_call_operand.vmem [shape: f32[2,4,256], index: 2, kind: output, shape index: {}, may-alias: {0,2}]
  %s3 = sld [smem:[#allocation0]]
  $region41: #{inplace_abn_forward.3} parent=0
    _
  %s5 = ssub.s32 1, %s3
  %s6 = scalar_select 0, %s5, %s3
  loop: start=0, step=1, limit=4
  $region2: #{inplace_abn_forward.3} parent=0 // loop_pre_header
    _
  $region3: #{inplace_abn_forward.3} parent=0 // loop_header
    %s8 = sphi 0, %s12
    %p9 = scmp.ge.s32.totalorder %s8, 4
    %s15 = sphi 0, %s34
    %s16 = sphi 0, %s30
    %s17 = sphi 0, %s26
    %s18 = sphi 0, %s15
    %s19 = sphi 0, %s16
    %s20 = sphi 0, %s17
    %s21 = sphi 0, %s18
    %s22 = sphi 0, %s19
    %s23 = sphi 0, %s20
    %s41 = sphi 0, %s43
    %s44 = sphi 0, %s41
    %s45 = sphi 0, %s44
    %s61 = sphi 0, %s45
    %s67 = sphi 0, %s69
    %s70 = sphi 0, %s67
    %s71 = sphi 0, %s70
    %s87 = sphi 0, %s71
    %s97 = sphi 0, %s99
    %s100 = sphi 0, %s97
    %s101 = sphi 0, %s100
    %s117 = sphi 0, %s101
  $region4: #{inplace_abn_forward.3} parent=0 // loop_header_branch
    %11 = sbr.rel (%p9) target = $region8
  $region5: #{inplace_abn_forward.3} parent=0 // loop_body
    %s13 = ssub.s32 %s8, 1
    %s14 = ssub.s32 %s8, 2
    %s24 = sadd.s32 1, %s17
    %p25 = scmp.ge.s32.totalorder %s24, 1
    %s26 = scalar_select %p25, 0, %s24
    %s27 = sadd.s32 1, %s16
    %s28 = scalar_select %p25, %s27, %s16
    %p29 = scmp.ge.s32.totalorder %s28, 2
    %s30 = scalar_select %p29, 0, %s28
    %s31 = sadd.s32 1, %s15
    %s32 = scalar_select %p29, %s31, %s15
    %p33 = scmp.ge.s32.totalorder %s32, 1
    %s34 = scalar_select %p33, 0, %s32
    %s35 = ssub.s32 %s16, %s30
    %s36 = ssub.s32 %s15, %s34
    %s37 = sor.u32 %s35, %s36
    %s38 = ssub.s32 %s17, %s26
    %s39 = sor.u32 %s37, %s38
    %p40 = scmp.eq.s32.totalorder %s39, 0
    %s42 = sadd.s32 %s41, 1
    %s43 = scalar_select %p40, %s41, %s42
    %p46 = pneg %p40
    %p47 = scmp.eq.s32.totalorder %s8, 1
    %p48 = por %p46, %p47
    %p49 = scmp.ne.s32.totalorder %s41, %s44
    %p50 = scmp.eq.s32.totalorder %s8, 0
    %p51 = por %p49, %p50
    %p52 = scmp.ne.s32.totalorder %s41, %s44
    %p53 = scmp.eq.s32.totalorder %s13, 1
    %p54 = por %p52, %p53
    %p55 = scmp.ne.s32.totalorder %s44, %s45
    %p56 = scmp.eq.s32.totalorder %s13, 0
    %p57 = por %p55, %p56
    %p58 = scmp.ne.s32.totalorder %s44, %s45
    %p59 = scmp.eq.s32.totalorder %s14, 1
    %p60 = por %p58, %p59
    %p62 = scmp.ne.s32.totalorder %s45, %s61
    %p63 = scmp.eq.s32.totalorder %s14, 0
    %p64 = por %p62, %p63
    %s65 = ssub.s32 %s15, %s34
    %p66 = scmp.eq.s32.totalorder %s65, 0
    %s68 = sadd.s32 %s67, 1
    %s69 = scalar_select %p66, %s67, %s68
    %p72 = pneg %p66
    %p73 = scmp.eq.s32.totalorder %s8, 1
    %p74 = por %p72, %p73
    %p75 = scmp.ne.s32.totalorder %s67, %s70
    %p76 = scmp.eq.s32.totalorder %s8, 0
    %p77 = por %p75, %p76
    %p78 = scmp.ne.s32.totalorder %s67, %s70
    %p79 = scmp.eq.s32.totalorder %s13, 1
    %p80 = por %p78, %p79
    %p81 = scmp.ne.s32.totalorder %s70, %s71
    %p82 = scmp.eq.s32.totalorder %s13, 0
    %p83 = por %p81, %p82
    %p84 = scmp.ne.s32.totalorder %s70, %s71
    %p85 = scmp.eq.s32.totalorder %s14, 1
    %p86 = por %p84, %p85
    %p88 = scmp.ne.s32.totalorder %s71, %s87
    %p89 = scmp.eq.s32.totalorder %s14, 0
    %p90 = por %p88, %p89
    %s91 = ssub.s32 %s16, %s30
    %s92 = ssub.s32 %s15, %s34
    %s93 = sor.u32 %s91, %s92
    %s94 = ssub.s32 %s17, %s26
    %s95 = sor.u32 %s93, %s94
    %p96 = scmp.eq.s32.totalorder %s95, 0
    %s98 = sadd.s32 %s97, 1
    %s99 = scalar_select %p96, %s97, %s98
    %p102 = pneg %p96
    %p103 = scmp.eq.s32.totalorder %s8, 1
    %p104 = por %p102, %p103
    %p105 = scmp.ne.s32.totalorder %s97, %s100
    %p106 = scmp.eq.s32.totalorder %s8, 0
    %p107 = por %p105, %p106
    %p108 = scmp.ne.s32.totalorder %s97, %s100
    %p109 = scmp.eq.s32.totalorder %s13, 1
    %p110 = por %p108, %p109
    %p111 = scmp.ne.s32.totalorder %s100, %s101
    %p112 = scmp.eq.s32.totalorder %s13, 0
    %p113 = por %p111, %p112
    %p114 = scmp.ne.s32.totalorder %s100, %s101
    %p115 = scmp.eq.s32.totalorder %s14, 1
    %p116 = por %p114, %p115
    %p118 = scmp.ne.s32.totalorder %s101, %s117
    %p119 = scmp.eq.s32.totalorder %s14, 0
    %p120 = por %p118, %p119
    %p121 = scmp.le.s32.totalorder 1, %s8
    %p122 = scmp.lt.s32.totalorder %s8, 3
    %p123 = pnand %p121, %p122
    %p124 = pneg %p123
    // Predicated region
    $region9: #{inplace_abn_forward.3} parent=5 // pred_check
      _
    $region10: #{inplace_abn_forward.3} parent=5 // pred_check_branch
      %126 = sbr.rel (%p123) target = $region12
    $region11: #{inplace_abn_forward.3} parent=5 // pred_region
      %s127 = ssub.s32 %s8, 1
      // Predicated region
      $region13: #{inplace_abn_forward.3} parent=11 // pred_check
        %p128 = pneg %p83
      $region14: #{inplace_abn_forward.3} parent=11 // pred_check_branch
        %130 = sbr.rel (%p128) target = $region16
      $region15: #{inplace_abn_forward.3} parent=11 // pred_region
        %p131 = scmp.lt.s32.totalorder %s18, 0
        %s132 = scalar_select %p131, %s18, 0
        %s133 = smul.addr %s132, 4
        %s134 = scalar_lea.vmem %s1, %s133
      $region16: #{inplace_abn_forward.3} parent=11 // pred_fallthru
        _
    $region12: #{inplace_abn_forward.3} parent=5 // pred_fallthru
      _
    %p135 = scmp.lt.s32.totalorder %s8, 2
    // Predicated region
    $region17: #{inplace_abn_forward.3} parent=5 // pred_check
      %p136 = pneg %p135
    $region18: #{inplace_abn_forward.3} parent=5 // pred_check_branch
      %138 = sbr.rel (%p136) target = $region20
    $region19: #{inplace_abn_forward.3} parent=5 // pred_region
      // Predicated region
      $region21: #{inplace_abn_forward.3} parent=19 // pred_check
        %p139 = pneg %p51
      $region22: #{inplace_abn_forward.3} parent=19 // pred_check_branch
        %141 = sbr.rel (%p139) target = $region24
      $region23: #{inplace_abn_forward.3} parent=19 // pred_region
        %s142 = smul.u32 2, %s17
        %p143 = scmp.lt.s32.totalorder %s16, 1
        %s144 = scalar_select %p143, %s16, 1
        %p145 = scmp.lt.s32.totalorder %s15, 0
        %s146 = scalar_select %p145, %s15, 0
        %p147 = scmp.lt.s32.totalorder %s142, 1
        %s148 = scalar_select %p147, %s142, 1
        %s149 = smul.addr %s146, 2
        %s150 = sadd.s32 %s148, %s149
        %s151 = smul.addr %s144, 2
        %s152 = sadd.s32 %s150, %s151
        %s153 = smul.addr %s152, 4
        %s154 = scalar_lea.vmem %s0, %s153
        %s155 = smul.u32 2, %s17
      $region24: #{inplace_abn_forward.3} parent=19 // pred_fallthru
        _
    $region20: #{inplace_abn_forward.3} parent=5 // pred_fallthru
      _
    %p156 = scmp.le.s32.totalorder 1, %s8
    %p157 = scmp.lt.s32.totalorder %s8, 3
    %p158 = pnand %p156, %p157
    %p159 = pneg %p158
    // Predicated region
    $region25: #{inplace_abn_forward.3} parent=5 // pred_check
      _
    $region26: #{inplace_abn_forward.3} parent=5 // pred_check_branch
      %161 = sbr.rel (%p158) target = $region28
    $region27: #{inplace_abn_forward.3} parent=5 // pred_region
      %s162 = ssub.s32 %s8, 1
      %s163 = smul.u32 2, %s20
      %p164 = scmp.lt.s32.totalorder %s19, 1
      %s165 = scalar_select %p164, %s19, 1
      %p166 = scmp.lt.s32.totalorder %s18, 0
      %s167 = scalar_select %p166, %s18, 0
      %p168 = scmp.lt.s32.totalorder %s163, 1
      %s169 = scalar_select %p168, %s163, 1
      %s170 = smul.addr %s167, 2
      %s171 = sadd.s32 %s169, %s170
      %s172 = smul.addr %s165, 2
      %s173 = sadd.s32 %s171, %s172
      %s174 = smul.addr %s173, 4
      %s175 = scalar_lea.vmem %s0, %s174
      %p176 = pneg %p57
      %p177 = pneg %p54
      %p178 = scmp.lt.s32.totalorder %s18, 0
      %s179 = scalar_select %p178, %s18, 0
      %s180 = smul.addr %s179, 4
      %s181 = scalar_lea.vmem %s1, %s180
      %p182 = pneg %p83
      %p183 = pneg %p80
      %p184 = pneg %p113
      %p185 = pneg %p110
      %s186 = smul.u32 2, %s20
      %p187 = scmp.lt.s32.totalorder %s19, 1
      %s188 = scalar_select %p187, %s19, 1
      %p189 = scmp.lt.s32.totalorder %s18, 0
      %s190 = scalar_select %p189, %s18, 0
      %p191 = scmp.lt.s32.totalorder %s186, 1
      %s192 = scalar_select %p191, %s186, 1
      %s193 = smul.addr %s190, 2
      %s194 = sadd.s32 %s192, %s193
      %s195 = smul.addr %s188, 2
      %s196 = sadd.s32 %s194, %s195
      %s197 = smul.addr %s196, 4
      %s198 = scalar_lea.vmem %s2, %s197
      %s199 = smul.u32 2, %s20
      %p200 = scmp.lt.s32.totalorder %s19, 1
      %s201 = scalar_select %p200, %s19, 1
      %p202 = scmp.lt.s32.totalorder %s18, 0
      %s203 = scalar_select %p202, %s18, 0
      %p204 = scmp.lt.s32.totalorder %s199, 1
      %s205 = scalar_select %p204, %s199, 1
      %s206 = smul.addr %s203, 2
      %s207 = sadd.s32 %s205, %s206
      %s208 = smul.addr %s201, 2
      %s209 = sadd.s32 %s207, %s208
      %s210 = smul.addr %s209, 4
      %s211 = scalar_lea.vmem %s0, %s210
      %s212 = smul.u32 2, %s20
      %p213 = scmp.lt.s32.totalorder %s18, 0
      %s214 = scalar_select %p213, %s18, 0
      %s215 = smul.addr %s214, 4
      %s216 = scalar_lea.vmem %s1, %s215
      %s217 = smul.u32 2, %s20
      %p218 = scmp.lt.s32.totalorder %s19, 1
      %s219 = scalar_select %p218, %s19, 1
      %p220 = scmp.lt.s32.totalorder %s18, 0
      %s221 = scalar_select %p220, %s18, 0
      %p222 = scmp.lt.s32.totalorder %s217, 1
      %s223 = scalar_select %p222, %s217, 1
      %s224 = smul.addr %s221, 2
      %s225 = sadd.s32 %s223, %s224
      %s226 = smul.addr %s219, 2
      %s227 = sadd.s32 %s225, %s226
      %s228 = smul.addr %s227, 4
      %s229 = scalar_lea.vmem %s2, %s228
      %s230 = smul.u32 2, %s20
      %v231 = vld [vmem:[%s211] sm:$0xff]
      %v232 = vld [vmem:[%s216] sm:$0xf]
      %234 = vset.pattern.permute.xlu0 0
      %235 = vperm.xlu0 %234, %v232
      %v236 = vpop.permute.xlu0 %235
      %v238 = vunpack.c.l.s4 839922192
      %v239 = vunpack.c.0.s8 %v238
      %v240 = vlaneseq
      %v241 = vshrl.u32 %v240, 7
      %v242 = vsub.s32 %v239, %v241
      %v243 = vrot.slane %v236, %v242
      %v245 = vmul.f32 %v231, %v243
      %246 = vset.pattern.permute.xlu0 1
      %247 = vperm.xlu0 %246, %v232
      %v248 = vpop.permute.xlu0 %247
      %v250 = vunpack.c.l.s4 839922192
      %v251 = vunpack.c.0.s8 %v250
      %v252 = vlaneseq
      %v253 = vshrl.u32 %v252, 7
      %v254 = vsub.s32 %v251, %v253
      %v255 = vrot.slane %v248, %v254
      %v257 = vadd.f32 %v245, %v255
      %vm258 = vcmp.ge.f32.partialorder %v257, 0.0
      %v259 = vmul.f32 %v257, 0.01
      %v260 = vsel %vm258, %v257, %v259
      %261 = vst [vmem:[%s229] sm:$0xff] %v260
      %s262 = smul.u32 2, %s20
      %p263 = scmp.lt.s32.totalorder %s19, 1
      %s264 = scalar_select %p263, %s19, 1
      %p265 = scmp.lt.s32.totalorder %s18, 0
      %s266 = scalar_select %p265, %s18, 0
      %p267 = scmp.lt.s32.totalorder %s262, 1
      %s268 = scalar_select %p267, %s262, 1
      %s269 = smul.addr %s266, 2
      %s270 = sadd.s32 %s268, %s269
      %s271 = smul.addr %s264, 2
      %s272 = sadd.s32 %s270, %s271
      %s273 = smul.addr %s272, 4
      %s274 = scalar_lea.vmem %s2, %s273
      // Predicated region
      $region29: #{inplace_abn_forward.3} parent=27 // pred_check
        %p275 = pneg %p110
      $region30: #{inplace_abn_forward.3} parent=27 // pred_check_branch
        %277 = sbr.rel (%p275) target = $region32
      $region31: #{inplace_abn_forward.3} parent=27 // pred_region
        %s278 = smul.u32 2, %s20
      $region32: #{inplace_abn_forward.3} parent=27 // pred_fallthru
        _
    $region28: #{inplace_abn_forward.3} parent=5 // pred_fallthru
      _
    %p279 = scmp.le.s32.totalorder 2, %s8
    // Predicated region
    $region33: #{inplace_abn_forward.3} parent=5 // pred_check
      %p280 = pneg %p279
    $region34: #{inplace_abn_forward.3} parent=5 // pred_check_branch
      %282 = sbr.rel (%p280) target = $region36
    $region35: #{inplace_abn_forward.3} parent=5 // pred_region
      %s283 = ssub.s32 %s8, 2
      // Predicated region
      $region37: #{inplace_abn_forward.3} parent=35 // pred_check
        %p284 = pneg %p116
      $region38: #{inplace_abn_forward.3} parent=35 // pred_check_branch
        %286 = sbr.rel (%p284) target = $region40
      $region39: #{inplace_abn_forward.3} parent=35 // pred_region
        %s287 = smul.u32 2, %s23
        %p288 = scmp.lt.s32.totalorder %s22, 1
        %s289 = scalar_select %p288, %s22, 1
        %p290 = scmp.lt.s32.totalorder %s21, 0
        %s291 = scalar_select %p290, %s21, 0
        %p292 = scmp.lt.s32.totalorder %s287, 1
        %s293 = scalar_select %p292, %s287, 1
        %s294 = smul.addr %s291, 2
        %s295 = sadd.s32 %s293, %s294
        %s296 = smul.addr %s289, 2
        %s297 = sadd.s32 %s295, %s296
        %s298 = smul.addr %s297, 4
        %s299 = scalar_lea.vmem %s2, %s298
      $region40: #{inplace_abn_forward.3} parent=35 // pred_fallthru
        _
    $region36: #{inplace_abn_forward.3} parent=5 // pred_fallthru
      _
  $region6: #{inplace_abn_forward.3} parent=0 // loop_footer
    %s12 = sadd.s32 1, %s8
  $region7: #{inplace_abn_forward.3} parent=0 // loop_footer_branch
    %7 = sbr.rel target = $region3
  $region8: #{inplace_abn_forward.3} parent=0 // loop_exit
    _

</llo_original>
